<compile_context>
chip_gen: v7x
topology: tpu7x:2x2x1
jax: 0.10.0
libtpu: 0.0.40
codegen_flags: <defaults>
</compile_context>

<pallas_src>
import functools

import jax
import jax.numpy as jnp
from jax import lax
from jax.experimental import pallas as pl
from jax.experimental.pallas import tpu as pltpu


def _round_up(x, m):
    return ((x + m - 1) // m) * m


# --------------------------------------------------------------------------
# Kernel 1: farthest point sampling (serial, once per batch).
# --------------------------------------------------------------------------
def _fps_kernel(pos_aug_ref, spos_ref, *, out_num):
    # pos_aug_ref: (1, 4, N) f32, rows 0:3 = xyz, row 3 = -0.5*||p||^2 (unused here)
    # spos_ref:    (1, 4, M_pad) f32 output, rows 0:3 = sampled xyz, row 3 = 1
    pa = pos_aug_ref[0]                                           # (4, N)
    pos3 = pa[0:3, :]                                             # (3, N)
    n = pos3.shape[1]
    m_pad = spos_ref.shape[-1]

    lane_iota = lax.broadcasted_iota(jnp.int32, (1, n), 1)        # (1, N)
    col_iota = lax.broadcasted_iota(jnp.int32, (1, m_pad), 1)     # (1, M_pad)

    sel0 = pos3[:, 0:1]                                           # seed = point 0
    spos0 = jnp.broadcast_to(sel0, (3, m_pad))                    # padded cols harmless
    mind0 = jnp.sum((pos3 - sel0) ** 2, axis=0, keepdims=True)    # (1, N)

    def fps_body(m, carry):
        spos, mind = carry
        # farthest point; lowest index wins on exact ties
        maxv = jnp.max(mind, axis=-1, keepdims=True)              # (1, 1)
        idx = jnp.min(jnp.where(mind == maxv, lane_iota, n),
                      axis=-1, keepdims=True)                     # (1, 1)
        onehot = (lane_iota == idx).astype(jnp.float32)           # (1, N)
        # TODO(synk): replace this masked lane-reduce with a dynamic sublane
        # read from an (N, 3)-layout copy once dynamic scalar VMEM reads are
        # verified to lower on all target generations.
        sel = jnp.sum(pos3 * onehot, axis=-1, keepdims=True)      # (3, 1)
        spos = jnp.where(col_iota == m, sel, spos)                # insert column m
        mind = jnp.minimum(
            mind, jnp.sum((pos3 - sel) ** 2, axis=0, keepdims=True))
        return spos, mind

    spos, _ = lax.fori_loop(1, out_num, fps_body, (spos0, mind0))

    spos_ref[0, 0:3, :] = spos
    spos_ref[0, 3:4, :] = jnp.ones((1, m_pad), jnp.float32)


# --------------------------------------------------------------------------
# Kernel 2: pairwise "similarity" + kNN one-hot accumulate + average.
# --------------------------------------------------------------------------
def _pool_kernel(feat_ref, pos_aug_ref, spos_ref, out_ref, *, k):
    # feat_ref:    (1, C, N)   native dtype
    # pos_aug_ref: (1, 4, N)   f32 [x; y; z; -0.5*||p||^2]
    # spos_ref:    (1, 4, TM)  f32 [x; y; z; 1]
    # out_ref:     (1, C, TM)
    feat = feat_ref[0]                                            # (C, N)
    pa = pos_aug_ref[0]                                           # (4, N)
    sa = spos_ref[0]                                              # (4, TM)
    n = pa.shape[1]

    # g[j, i] = pos_j . spos_i - 0.5*||pos_j||^2  (MXU, contract dim 0 / dim 0)
    # argmax_j g[:, i] == argmin_j ||pos_j - spos_i||^2
    g = lax.dot_general(pa, sa, (((0,), (0,)), ((), ())),
                        preferred_element_type=jnp.float32)       # (N, TM)

    row_iota = lax.broadcasted_iota(jnp.int32, (n, 1), 0)         # (N, 1)
    neg_inf = jnp.float32(-jnp.inf)
    sel_dtype = jnp.bfloat16 if feat.dtype == jnp.bfloat16 else jnp.float32
    # TODO(synk): optionally keep g in bf16 on v6e/v7x (native bf16 VALU) after
    # validating near-tie neighbour selection against the f32 reference.

    def knn_body(_, carry):
        g_c, sel_acc = carry
        colmax = jnp.max(g_c, axis=0, keepdims=True)              # (1, TM)
        idx = jnp.min(jnp.where(g_c == colmax, row_iota, n),
                      axis=0, keepdims=True)                      # (1, TM), lowest idx on ties
        mask = row_iota == idx                                    # (N, TM), one row per column
        sel_acc = sel_acc + mask.astype(sel_dtype)                # disjoint rows -> exact
        g_c = jnp.where(mask, neg_inf, g_c)                       # exclude chosen neighbours
        return g_c, sel_acc

    sel_acc0 = jnp.zeros(g.shape, sel_dtype)
    _, sel_acc = lax.fori_loop(0, k, knn_body, (g, sel_acc0))

    # Single gather+sum on the MXU: (C, N) @ (N, TM) -> (C, TM)
    pooled = jnp.dot(feat, sel_acc, preferred_element_type=jnp.float32)
    out_ref[0] = (pooled * (1.0 / k)).astype(out_ref.dtype)


# --------------------------------------------------------------------------
# Wrapper.
# --------------------------------------------------------------------------
def point_avg_pool(inputs, inputs_pos, target_num, fix_fps=True):
    """Pallas implementation of PointAvgPool.forward."""
    b, c, n = inputs.shape
    assert inputs_pos.shape == (b, 3, n)
    do_fps = n > target_num
    out_num = target_num if do_fps else n
    # kernel_size == stride == n // target_num; remainder points are dropped,
    # matching the original module's stride semantics.
    k = max(n // target_num, 1)
    # TODO(synk): fix_fps=False in the original selects a random FPS seed point;
    # here the seed point is always index 0 (matches fix_fps=True determinism).
    del fix_fps

    feat_bytes = jnp.dtype(inputs.dtype).itemsize

    # ---- per-generation VMEM budget and sampled-point (M) axis tiling -------
    try:
        vmem_cap = int(getattr(pltpu.get_tpu_info(), "vmem_capacity_bytes",
                               64 * 1024 * 1024))
    except Exception:
        vmem_cap = 64 * 1024 * 1024                       # conservative (v7x)
    budget = int(0.70 * vmem_cap)

    def _step_bytes(tm):
        inter = 4 * 4 * n * tm                            # g carry + sel_acc + mask + slack
        return (inter
                + 2 * c * n * feat_bytes                  # resident feature slab (2 bufs)
                + 2 * 8 * n * 4                           # pos_aug block (sublane-padded)
                + 2 * 8 * tm * 4                          # spos_aug block
                + 2 * c * tm * feat_bytes)                # output block

    tm = 128
    for cand in (512, 384, 256, 128):
        if _step_bytes(cand) <= budget:
            tm = cand
            break
    # TODO(synk): if even TM=128 exceeds the budget (huge N*C), tile N as well.
    tm = min(tm, _round_up(out_num, 128))                 # never wider than needed
    m_pad = _round_up(out_num, tm)                        # lane-dense padded M

    # ---- augmented positions: [x; y; z; -0.5*||p||^2]  (layout plumbing) ----
    pos32 = inputs_pos.astype(jnp.float32)
    p2 = jnp.sum(pos32 * pos32, axis=1, keepdims=True)    # (B, 1, N)
    pos_aug = jnp.concatenate([pos32, -0.5 * p2], axis=1)  # (B, 4, N)

    # ---- FPS (separate small kernel; heavy phase stays megacore-parallel) ---
    if do_fps:
        spos_aug = pl.pallas_call(
            functools.partial(_fps_kernel, out_num=out_num),
            out_shape=jax.ShapeDtypeStruct((b, 4, m_pad), jnp.float32),
            grid_spec=pltpu.PrefetchScalarGridSpec(
                num_scalar_prefetch=0,
                grid=(b,),
                in_specs=[pl.BlockSpec((1, 4, n), lambda i: (i, 0, 0))],
                out_specs=pl.BlockSpec((1, 4, m_pad), lambda i: (i, 0, 0))),
            compiler_params=pltpu.CompilerParams(
                dimension_semantics=("parallel",)),
        )(pos_aug)
        sampled_pos = spos_aug[:, 0:3, :out_num].astype(inputs_pos.dtype)
    else:
        # n <= target_num: keep all positions (out_num == n).
        ones = jnp.ones((b, 1, n), jnp.float32)
        spos_aug = jnp.concatenate([pos32, ones], axis=1)          # (B, 4, n)
        if m_pad > n:
            spos_aug = jnp.pad(spos_aug, ((0, 0), (0, 0), (0, m_pad - n)))
        sampled_pos = inputs_pos

    # ---- heavy kernel: distance / kNN / average, tiled over (B, M) ----------
    vmem_limit = min(int(0.90 * vmem_cap),
                     max(int(1.5 * _step_bytes(tm)), 64 * 1024 * 1024))
    cost = pl.CostEstimate(
        flops=int(b * (2 * c * n * m_pad + 2 * 4 * n * m_pad)),
        transcendentals=0,
        bytes_accessed=int(b * (c * n * feat_bytes + 4 * n * 4
                                + 4 * m_pad * 4 + c * m_pad * feat_bytes)))

    pooled = pl.pallas_call(
        functools.partial(_pool_kernel, k=k),
        out_shape=jax.ShapeDtypeStruct((b, c, m_pad), inputs.dtype),
        grid_spec=pltpu.PrefetchScalarGridSpec(
            num_scalar_prefetch=0,
            grid=(b, m_pad // tm),                         # m innermost
            in_specs=[
                pl.BlockSpec((1, c, n), lambda bi, mi: (bi, 0, 0)),   # resident
                pl.BlockSpec((1, 4, n), lambda bi, mi: (bi, 0, 0)),   # resident
                pl.BlockSpec((1, 4, tm), lambda bi, mi: (bi, 0, mi)),
            ],
            out_specs=pl.BlockSpec((1, c, tm), lambda bi, mi: (bi, 0, mi))),
        compiler_params=pltpu.CompilerParams(
            dimension_semantics=("parallel", "parallel"),
            vmem_limit_bytes=vmem_limit),
        cost_estimate=cost,
    )(inputs, pos_aug, spos_aug)

    return pooled[:, :, :out_num], sampled_pos


# --------------------------------------------------------------------------
# Pure-JAX reference (self-check only).
# --------------------------------------------------------------------------
def _reference(inputs, inputs_pos, target_num):
    b, c, n = inputs.shape
    do_fps = n > target_num
    out_num = target_num if do_fps else n
    k = max(n // target_num, 1)
    pos = inputs_pos.astype(jnp.float32)

    def fps_one(p):                                       # p: (3, n)
        mind0 = jnp.sum((p - p[:, 0:1]) ** 2, axis=0)
        idxs0 = jnp.zeros((out_num,), jnp.int32)

        def body(m, carry):
            idxs, mind = carry
            far = jnp.argmax(mind).astype(jnp.int32)
            sel = jnp.take(p, far, axis=1)[:, None]
            return (idxs.at[m].set(far),
                    jnp.minimum(mind, jnp.sum((p - sel) ** 2, axis=0)))

        idxs, _ = lax.fori_loop(1, out_num, body, (idxs0, mind0))
        return idxs

    if do_fps:
        sidx = jax.vmap(fps_one)(pos)                                 # (b, out_num)
        gidx = jnp.broadcast_to(sidx[:, None, :], (b, 3, out_num))
        spos = jnp.take_along_axis(pos, gidx, axis=-1)
    else:
        spos = pos

    d = (jnp.sum(pos * pos, axis=1)[:, :, None]
         + jnp.sum(spos * spos, axis=1)[:, None, :]
         - 2.0 * jnp.einsum("bdn,bdm->bnm", pos, spos))               # (b, n, m)
    nn_idx = jnp.argsort(d, axis=1)[:, :k, :]                          # (b, k, m)

    def gather_one(f, idx):                                            # f (c, n)
        return jnp.mean(f[:, idx], axis=1)                             # (c, m)

    pooled = jax.vmap(gather_one)(inputs.astype(jnp.float32), nn_idx)
    return pooled.astype(inputs.dtype), spos.astype(inputs_pos.dtype)


if __name__ == "__main__":
    key = jax.random.PRNGKey(0)
    k1, k2 = jax.random.split(key)

    b, c, n = 2, 4, 16
    target_num = 8                        # -> stride = kernel_size = 2

    inputs = jax.random.normal(k1, (b, c, n), dtype=jnp.float32)
    inputs_pos = jax.random.normal(k2, (b, 3, n), dtype=jnp.float32)

    feat_out, pos_out = point_avg_pool(inputs, inputs_pos, target_num,
                                       fix_fps=True)
    jax.block_until_ready((feat_out, pos_out))

    assert feat_out.shape == (b, c, target_num), feat_out.shape
    assert pos_out.shape == (b, 3, target_num), pos_out.shape
    assert bool(jnp.all(jnp.isfinite(feat_out)))
    assert bool(jnp.all(jnp.isfinite(pos_out)))

    ref_feat, ref_pos = _reference(inputs, inputs_pos, target_num)
    assert bool(jnp.allclose(pos_out, ref_pos, rtol=1e-5, atol=1e-5)), "pos mismatch"
    assert bool(jnp.allclose(feat_out, ref_feat, rtol=1e-4, atol=1e-4)), "feat mismatch"
    print("KERNEL_OK")
</pallas_src>

<mosaic_0001>
module attributes {stable_mosaic.version = 11 : i64} {
  func.func @_fps_kernel(%arg0: i32, %arg1: memref<1x4x16xf32, #tpu.memory_space<vmem>>, %arg2: memref<1x4x128xf32, #tpu.memory_space<vmem>>) attributes {dimension_semantics = [#tpu.dimension_semantics<parallel>], iteration_bounds = array<i64: 2>, scalar_prefetch = 0 : i64, scratch_operands = 0 : i64, tpu.core_type = #tpu.core_type<tc>, window_params = [{transform_indices = @transform_0, window_bounds = array<i64: 1, 4, 16>}, {transform_indices = @transform_1, window_bounds = array<i64: 1, 4, 128>}]} {
    %c0 = arith.constant 0 : index
    %c0_0 = arith.constant 0 : index
    %c0_1 = arith.constant 0 : index
    %0 = vector.load %arg1[%c0, %c0_0, %c0_1] : memref<1x4x16xf32, #tpu.memory_space<vmem>>, vector<1x4x16xf32>
    %1 = vector.shape_cast %0 : vector<1x4x16xf32> to vector<4x16xf32>
    %2 = vector.extract_strided_slice %1 {offsets = [0, 0], sizes = [3, 16], strides = [1, 1]} : vector<4x16xf32> to vector<3x16xf32>
    %3 = tpu.iota {dimensions = array<i32: 1>} : vector<1x16xi32>
    %4 = tpu.iota {dimensions = array<i32: 1>} : vector<1x128xi32>
    %5 = vector.extract_strided_slice %2 {offsets = [0, 0], sizes = [3, 1], strides = [1, 1]} : vector<3x16xf32> to vector<3x1xf32>
    %6 = vector.shape_cast %5 : vector<3x1xf32> to vector<3x1xf32>
    %7 = vector.broadcast %6 : vector<3x1xf32> to vector<3x128xf32>
    %8 = vector.broadcast %5 : vector<3x1xf32> to vector<3x16xf32>
    %9 = arith.subf %2, %8 : vector<3x16xf32>
    %10 = arith.mulf %9, %9 : vector<3x16xf32>
    %cst = arith.constant dense<0.000000e+00> : vector<16xf32>
    %11 = vector.multi_reduction <add>, %10, %cst [0] : vector<3x16xf32> to vector<16xf32>
    %12 = vector.shape_cast %11 : vector<16xf32> to vector<1x16xf32>
    %c1_i32 = arith.constant 1 : i32
    %c7_i32 = arith.constant 7 : i32
    %13 = arith.addi %c1_i32, %c7_i32 : i32
    %c1_i32_2 = arith.constant 1 : i32
    %14:2 = scf.for %arg3 = %c1_i32 to %13 step %c1_i32_2 iter_args(%arg4 = %7, %arg5 = %12) -> (vector<3x128xf32>, vector<1x16xf32>)  : i32 {
      %cst_10 = arith.constant dense<0xFF800000> : vector<1xf32>
      %22 = vector.multi_reduction <maximumf>, %arg5, %cst_10 [1] : vector<1x16xf32> to vector<1xf32>
      %23 = vector.shape_cast %22 : vector<1xf32> to vector<1x1xf32>
      %24 = vector.broadcast %23 : vector<1x1xf32> to vector<1x16xf32>
      %25 = arith.cmpf oeq, %arg5, %24 : vector<1x16xf32>
      %c16_i32 = arith.constant 16 : i32
      %26 = vector.broadcast %c16_i32 : i32 to vector<1x16xi32>
      %27 = arith.select %25, %3, %26 : vector<1x16xi1>, vector<1x16xi32>
      %cst_11 = arith.constant dense<2147483647> : vector<1xi32>
      %28 = vector.multi_reduction <minsi>, %27, %cst_11 [1] : vector<1x16xi32> to vector<1xi32>
      %29 = vector.shape_cast %28 : vector<1xi32> to vector<1x1xi32>
      %30 = vector.broadcast %29 : vector<1x1xi32> to vector<1x16xi32>
      %31 = arith.cmpi eq, %3, %30 : vector<1x16xi32>
      %32 = arith.extui %31 : vector<1x16xi1> to vector<1x16xi32>
      %33 = arith.sitofp %32 : vector<1x16xi32> to vector<1x16xf32>
      %34 = vector.broadcast %33 : vector<1x16xf32> to vector<3x16xf32>
      %35 = arith.mulf %2, %34 : vector<3x16xf32>
      %cst_12 = arith.constant dense<0.000000e+00> : vector<3xf32>
      %36 = vector.multi_reduction <add>, %35, %cst_12 [1] : vector<3x16xf32> to vector<3xf32>
      %37 = vector.shape_cast %36 : vector<3xf32> to vector<3x1xf32>
      %38 = vector.broadcast %arg3 : i32 to vector<1x128xi32>
      %39 = arith.cmpi eq, %4, %38 : vector<1x128xi32>
      %40 = vector.shape_cast %39 : vector<1x128xi1> to vector<1x128xi1>
      %41 = vector.broadcast %40 : vector<1x128xi1> to vector<3x128xi1>
      %42 = vector.shape_cast %37 : vector<3x1xf32> to vector<3x1xf32>
      %43 = vector.broadcast %42 : vector<3x1xf32> to vector<3x128xf32>
      %44 = arith.select %41, %43, %arg4 : vector<3x128xi1>, vector<3x128xf32>
      %45 = vector.broadcast %37 : vector<3x1xf32> to vector<3x16xf32>
      %46 = arith.subf %2, %45 : vector<3x16xf32>
      %47 = arith.mulf %46, %46 : vector<3x16xf32>
      %cst_13 = arith.constant dense<0.000000e+00> : vector<16xf32>
      %48 = vector.multi_reduction <add>, %47, %cst_13 [0] : vector<3x16xf32> to vector<16xf32>
      %49 = vector.shape_cast %48 : vector<16xf32> to vector<1x16xf32>
      %50 = arith.minimumf %arg5, %49 : vector<1x16xf32>
      scf.yield %44, %50 : vector<3x128xf32>, vector<1x16xf32>
    }
    %c7_i32_3 = arith.constant 7 : i32
    %c0_4 = arith.constant 0 : index
    %c0_5 = arith.constant 0 : index
    %c0_6 = arith.constant 0 : index
    %15 = vector.load %arg2[%c0_4, %c0_5, %c0_6] : memref<1x4x128xf32, #tpu.memory_space<vmem>>, vector<1x3x128xf32>
    %16 = vector.shape_cast %15 : vector<1x3x128xf32> to vector<3x128xf32>
    %17 = vector.shape_cast %14#0 : vector<3x128xf32> to vector<1x3x128xf32>
    tpu.vector_store %arg2[%c0_4, %c0_5, %c0_6], %17 {strides = array<i32>} : memref<1x4x128xf32, #tpu.memory_space<vmem>>, vector<1x3x128xf32>,
    %cst_7 = arith.constant 1.000000e+00 : f32
    %18 = vector.broadcast %cst_7 : f32 to vector<1x128xf32>
    %c0_8 = arith.constant 0 : index
    %c3 = arith.constant 3 : index
    %c0_9 = arith.constant 0 : index
    %19 = vector.load %arg2[%c0_8, %c3, %c0_9] : memref<1x4x128xf32, #tpu.memory_space<vmem>>, vector<1x1x128xf32>
    %20 = vector.shape_cast %19 : vector<1x1x128xf32> to vector<1x128xf32>
    %21 = vector.shape_cast %18 : vector<1x128xf32> to vector<1x1x128xf32>
    tpu.vector_store %arg2[%c0_8, %c3, %c0_9], %21 {strides = array<i32>} : memref<1x4x128xf32, #tpu.memory_space<vmem>>, vector<1x1x128xf32>,
    return
  }
  func.func @transform_0(%arg0: i32) -> (i32, i32, i32) {
    %c0_i32 = arith.constant 0 : i32
    %c0_i32_0 = arith.constant 0 : i32
    %c0_i32_1 = arith.constant 0 : i32
    return %arg0, %c0_i32, %c0_i32_0 : i32, i32, i32
  }
  func.func @transform_1(%arg0: i32) -> (i32, i32, i32) {
    %c0_i32 = arith.constant 0 : i32
    %c0_i32_0 = arith.constant 0 : i32
    %c0_i32_1 = arith.constant 0 : i32
    return %arg0, %c0_i32, %c0_i32_0 : i32, i32, i32
  }
}

</mosaic_0001>

<llo_original>
// kernel: tpu_custom_call.1
$region0: #{tpu_custom_call.1}
  #allocation0 [shape = 'u32[]', space=smem, size = 0x4, offset = 0x4, fixed_abs, tag = 'smem constant byte address 0x4 - core index']
  #allocation1 [shape = 'u32[144,128]{1,0:T(1,128)}', space=vmem, size = 0x12000, scoped, tag = 'internal scratch']
  %s0 = inlined_call_operand.hbm [shape: f32[2,4,16], index: 0, kind: input, shape index: {}]
  %s1 = inlined_call_operand.hbm [shape: f32[2,4,128], index: 1, kind: output, shape index: {}]
  %s2 = sld [smem:[#allocation0]]
  $region48: #{tpu_custom_call.1} parent=0
    _
  %s4 = ssub.s32 1, %s2
  %s5 = scalar_select 0, %s4, %s2
  $region1: #{tpu_custom_call.1} parent=0
    #allocation2 [shape = 'u8[4096]{0}', space=vmem, size = 0x1000, scoped, tag = 'input window, operand 0']
    #allocation3 [shape = 's32[2]{0}', space=sflag, size = 0x8, scoped, tag = 'scoped memory for tpu_custom_call.1']
    #allocation4 [shape = 's32[2]{0}', space=sflag, size = 0x8, scoped, tag = 'scoped memory for tpu_custom_call.1']
    #allocation5 [shape = 'u8[4096]{0}', space=vmem, size = 0x1000, scoped, tag = 'output window, operand 0']
    %6 = vsyncpa [#allocation3], 0
    %s7 = scalar_lea.sflag [#allocation3], 1
    %8 = vsyncpa %s7, 0
    %9 = vsyncpa [#allocation4], 0
    %s10 = scalar_lea.sflag [#allocation4], 1
    %11 = vsyncpa %s10, 0
    loop: start=0, step=1, limit=4
    $region2: #{tpu_custom_call.1} parent=1 // loop_pre_header
      _
    $region3: #{tpu_custom_call.1} parent=1 // loop_header
      %s13 = sphi 0, %s17
      %p14 = scmp.ge.s32.totalorder %s13, 4
      %s23 = sphi 0, %s25
      %s26 = sphi 0, %s23
      %s27 = sphi 0, %s26
      %s43 = sphi 0, %s27
      %s49 = sphi 0, %s51
      %s52 = sphi 0, %s49
      %s53 = sphi 0, %s52
      %s69 = sphi 0, %s53
    $region4: #{tpu_custom_call.1} parent=1 // loop_header_branch
      %16 = sbr.rel (%p14) target = $region8
    $region5: #{tpu_custom_call.1} parent=1 // loop_body
      %s18 = ssub.s32 %s13, 1
      %s19 = ssub.s32 %s13, 2
      %s20 = sadd.s32 %s13, 1
      %s21 = ssub.s32 %s13, %s20
      %p22 = scmp.eq.s32.totalorder %s21, 0
      %s24 = sadd.s32 %s23, 1
      %s25 = scalar_select %p22, %s23, %s24
      %p28 = pneg %p22
      %p29 = scmp.eq.s32.totalorder %s13, 1
      %p30 = por %p28, %p29
      %p31 = scmp.ne.s32.totalorder %s23, %s26
      %p32 = scmp.eq.s32.totalorder %s13, 0
      %p33 = por %p31, %p32
      %p34 = scmp.ne.s32.totalorder %s23, %s26
      %p35 = scmp.eq.s32.totalorder %s18, 1
      %p36 = por %p34, %p35
      %p37 = scmp.ne.s32.totalorder %s26, %s27
      %p38 = scmp.eq.s32.totalorder %s18, 0
      %p39 = por %p37, %p38
      %p40 = scmp.ne.s32.totalorder %s26, %s27
      %p41 = scmp.eq.s32.totalorder %s19, 1
      %p42 = por %p40, %p41
      %p44 = scmp.ne.s32.totalorder %s27, %s43
      %p45 = scmp.eq.s32.totalorder %s19, 0
      %p46 = por %p44, %p45
      %s47 = ssub.s32 %s13, %s20
      %p48 = scmp.eq.s32.totalorder %s47, 0
      %s50 = sadd.s32 %s49, 1
      %s51 = scalar_select %p48, %s49, %s50
      %p54 = pneg %p48
      %p55 = scmp.eq.s32.totalorder %s13, 1
      %p56 = por %p54, %p55
      %p57 = scmp.ne.s32.totalorder %s49, %s52
      %p58 = scmp.eq.s32.totalorder %s13, 0
      %p59 = por %p57, %p58
      %p60 = scmp.ne.s32.totalorder %s49, %s52
      %p61 = scmp.eq.s32.totalorder %s18, 1
      %p62 = por %p60, %p61
      %p63 = scmp.ne.s32.totalorder %s52, %s53
      %p64 = scmp.eq.s32.totalorder %s18, 0
      %p65 = por %p63, %p64
      %p66 = scmp.ne.s32.totalorder %s52, %s53
      %p67 = scmp.eq.s32.totalorder %s19, 1
      %p68 = por %p66, %p67
      %p70 = scmp.ne.s32.totalorder %s53, %s69
      %p71 = scmp.eq.s32.totalorder %s19, 0
      %p72 = por %p70, %p71
      %p73 = scmp.le.s32.totalorder 1, %s13
      %p74 = scmp.lt.s32.totalorder %s13, 3
      %p75 = pnand %p73, %p74
      %p76 = pneg %p75
      // Predicated region
      $region9: #{tpu_custom_call.1} parent=5 // pred_check
        _
      $region10: #{tpu_custom_call.1} parent=5 // pred_check_branch
        %78 = sbr.rel (%p75) target = $region12
      $region11: #{tpu_custom_call.1} parent=5 // pred_region
        %s79 = ssub.s32 %s13, 1
      $region12: #{tpu_custom_call.1} parent=5 // pred_fallthru
        _
      %p80 = scmp.lt.s32.totalorder %s13, 2
      // Predicated region
      $region13: #{tpu_custom_call.1} parent=5 // pred_check
        %p81 = pneg %p80
      $region14: #{tpu_custom_call.1} parent=5 // pred_check_branch
        %83 = sbr.rel (%p81) target = $region16
      $region15: #{tpu_custom_call.1} parent=5 // pred_region
        // Predicated region
        $region17: #{tpu_custom_call.1} parent=15 // pred_check
          %p84 = pneg %p33
        $region18: #{tpu_custom_call.1} parent=15 // pred_check_branch
          %86 = sbr.rel (%p84) target = $region20
        $region19: #{tpu_custom_call.1} parent=15 // pred_region
          %s87 = sand.u32 %s23, 1
          %s88 = scalar_lea.sflag [#allocation3], %s87
          %s89 = sand.u32 %s23, 1
          %s90 = smul.addr %s89, 4
          %s91 = scalar_lea.vmem [#allocation2], %s90
          %s93 = ssub.s32 64, 64
          %94 = vsyncadd %s88, %s93
          %s95 = smul.addr %s13, 64
          %s96 = scalar_lea.hbm %s0, %s95
          %s98 = sshll.u32 %s91, 4
          %s99 = int_to_ptr.vmem [resolvable:$true] %s98
          %101 = dma.hbm_to_vmem [thread:$0]  %s96, 64, %s99, %s88
        $region20: #{tpu_custom_call.1} parent=15 // pred_fallthru
          _
      $region16: #{tpu_custom_call.1} parent=5 // pred_fallthru
        _
      %p102 = scmp.le.s32.totalorder 1, %s13
      %p103 = scmp.lt.s32.totalorder %s13, 3
      %p104 = pnand %p102, %p103
      %p105 = pneg %p104
      // Predicated region
      $region21: #{tpu_custom_call.1} parent=5 // pred_check
        _
      $region22: #{tpu_custom_call.1} parent=5 // pred_check_branch
        %107 = sbr.rel (%p104) target = $region24
      $region23: #{tpu_custom_call.1} parent=5 // pred_region
        %s108 = ssub.s32 %s13, 1
        %s109 = sand.u32 %s26, 1
        %s110 = scalar_lea.sflag [#allocation3], %s109
        %s111 = sand.u32 %s26, 1
        %s112 = smul.addr %s111, 4
        %s113 = scalar_lea.vmem [#allocation2], %s112
        // Predicated region
        $region25: #{tpu_custom_call.1} parent=23 // pred_check
          %p114 = pneg %p39
        $region26: #{tpu_custom_call.1} parent=23 // pred_check_branch
          %116 = sbr.rel (%p114) target = $region28
        $region27: #{tpu_custom_call.1} parent=23 // pred_region
          %117 = dma.done %s110, 64
        $region28: #{tpu_custom_call.1} parent=23 // pred_fallthru
          _
        %s118 = sand.u32 %s26, 1
        %s119 = scalar_lea.sflag [#allocation3], %s118
        %s120 = sand.u32 %s26, 1
        %s121 = smul.addr %s120, 4
        %s122 = scalar_lea.vmem [#allocation2], %s121
        %p123 = pneg %p39
        %p124 = pneg %p36
        %p125 = pneg %p65
        %p126 = pneg %p62
        %s127 = sand.u32 %s52, 1
        %s128 = scalar_lea.sflag [#allocation4], %s127
        %s129 = sand.u32 %s52, 1
        %s130 = smul.addr %s129, 4
        %s131 = scalar_lea.vmem [#allocation5], %s130
        %v132 = vld [vmem:[%s113] sm:$0xf]
        %v133 = vlaneseq
        %v134 = vand.u32 %v133, 127
        %136 = vset.pattern.permute.xlu0 0
        %137 = vperm.xlu0 %136, %v132
        %v138 = vpop.permute.xlu0 %137
        %v140 = vsub.f32 %v132, %v138
        %v141 = vmul.f32 %v140, %v140
        %vm142 = vcmask 124928
        %v143 = vsel %vm142, %v141, 0.0
        %v144 = vrot.slane %v143, 4
        %v145 = vadd.f32 %v143, %v144
        %v146 = vrot.slane %v145, 2
        %v147 = vadd.f32 %v145, %v146
        %v148 = vrot.slane %v147, 1
        %v149 = vadd.f32 %v147, %v148
        loop: start=1, step=1, limit=8
        $region29: #{tpu_custom_call.1} parent=23 // loop_pre_header
          _
        $region30: #{tpu_custom_call.1} parent=23 // loop_header
          %s151 = sphi 1, %s155
          %p152 = scmp.ge.s32.totalorder %s151, 8
          %v156 = vphi %v138, %v190
          %v157 = vphi %v149, %v200
        $region31: #{tpu_custom_call.1} parent=23 // loop_header_branch
          %154 = sbr.rel (%p152) target = $region35
        $region32: #{tpu_custom_call.1} parent=23 // loop_body
          %vm158 = vcmask 130048
          %v159 = vsel %vm158, %v157, -inf
          %160 = vmax.xlane.f32.xlu0 %v159
          %v161 = vpop.xlane.xlu0 %160
          %vm162 = vcmp.eq.f32.partialorder %v157, %v161
          %v163 = vsel %vm162, %v134, 16
          %v164 = vsel %vm158, %v163, 2147483647
          %v165 = vand.u32 %v164, 65535
          %v166 = vshra.s32 %v164, 16
          %v167 = vcvt.s32.f32 %v165
          %v168 = vcvt.s32.f32 %v166
          %169 = vmin.xlane.f32.xlu0 %v168
          %v170 = vpop.xlane.xlu0 %169
          %vm171 = vcmp.eq.f32.partialorder %v168, %v170
          %v172 = vsel %vm171, %v167, inf
          %173 = vmin.xlane.f32.xlu0 %v172
          %v174 = vpop.xlane.xlu0 %173
          %v175 = vcvt.f32.s32 %v174
          %v176 = vcvt.f32.s32 %v170
          %v177 = vshll.u32 %v176, 16
          %v178 = vadd.s32 %v177, %v175
          %vm179 = vcmp.eq.s32.totalorder %v134, %v178
          %v180 = vsel %vm179, 1, 0
          %v181 = vcvt.s32.f32 %v180
          %v182 = vmul.f32 %v132, %v181
          %v183 = vsel %vm142, %v182, 0.0
          %184 = vadd.xlane.f32.xlu0 %v183
          %v185 = vpop.xlane.xlu0 %184
          %v186 = vstv %s151
          %vm187 = vcmp.eq.s32.totalorder %v134, %v186
          %v188 = vsel %vm187, 1, 0
          %vm189 = vcmp.eq.s32.totalorder %v188, 1
          %v190 = vsel %vm189, %v185, %v156
          %v191 = vsub.f32 %v132, %v185
          %v192 = vmul.f32 %v191, %v191
          %v193 = vsel %vm142, %v192, 0.0
          %v194 = vrot.slane %v193, 4
          %v195 = vadd.f32 %v193, %v194
          %v196 = vrot.slane %v195, 2
          %v197 = vadd.f32 %v195, %v196
          %v198 = vrot.slane %v197, 1
          %v199 = vadd.f32 %v197, %v198
          %v200 = vmin.f32 %v157, %v199
        $region33: #{tpu_custom_call.1} parent=23 // loop_footer
          %s155 = sadd.s32 1, %s151
        $region34: #{tpu_custom_call.1} parent=23 // loop_footer_branch
          %150 = sbr.rel target = $region30
        $region35: #{tpu_custom_call.1} parent=23 // loop_exit
          _
        %201 = vst [vmem:[%s131] sm:$0x7] %v156
        %202 = vst [vmem:[%s131 + $0x3] sm:$0x1] 1.0
        %s203 = sand.u32 %s52, 1
        %s204 = scalar_lea.sflag [#allocation4], %s203
        %s205 = sand.u32 %s52, 1
        %s206 = smul.addr %s205, 4
        %s207 = scalar_lea.vmem [#allocation5], %s206
        // Predicated region
        $region36: #{tpu_custom_call.1} parent=23 // pred_check
          %p208 = pneg %p62
        $region37: #{tpu_custom_call.1} parent=23 // pred_check_branch
          %210 = sbr.rel (%p208) target = $region39
        $region38: #{tpu_custom_call.1} parent=23 // pred_region
          %s212 = ssub.s32 64, 64
          %213 = vsyncadd %s204, %s212
          %s214 = smul.addr %s18, 64
          %s215 = scalar_lea.hbm %s1, %s214
          %s217 = sshll.u32 %s207, 4
          %s218 = int_to_ptr.vmem [resolvable:$true] %s217
          %220 = dma.vmem_to_hbm [thread:$0]  %s218, 64, %s215, %s204
        $region39: #{tpu_custom_call.1} parent=23 // pred_fallthru
          _
      $region24: #{tpu_custom_call.1} parent=5 // pred_fallthru
        _
      %p221 = scmp.le.s32.totalorder 2, %s13
      // Predicated region
      $region40: #{tpu_custom_call.1} parent=5 // pred_check
        %p222 = pneg %p221
      $region41: #{tpu_custom_call.1} parent=5 // pred_check_branch
        %224 = sbr.rel (%p222) target = $region43
      $region42: #{tpu_custom_call.1} parent=5 // pred_region
        %s225 = ssub.s32 %s13, 2
        // Predicated region
        $region44: #{tpu_custom_call.1} parent=42 // pred_check
          %p226 = pneg %p68
        $region45: #{tpu_custom_call.1} parent=42 // pred_check_branch
          %228 = sbr.rel (%p226) target = $region47
        $region46: #{tpu_custom_call.1} parent=42 // pred_region
          %s229 = sand.u32 %s53, 1
          %s230 = scalar_lea.sflag [#allocation4], %s229
          %s231 = sand.u32 %s53, 1
          %s232 = smul.addr %s231, 4
          %s233 = scalar_lea.vmem [#allocation5], %s232
          %234 = dma.done %s230, 64
        $region47: #{tpu_custom_call.1} parent=42 // pred_fallthru
          _
      $region43: #{tpu_custom_call.1} parent=5 // pred_fallthru
        _
    $region6: #{tpu_custom_call.1} parent=1 // loop_footer
      %s17 = sadd.s32 1, %s13
    $region7: #{tpu_custom_call.1} parent=1 // loop_footer_branch
      %12 = sbr.rel target = $region3
    $region8: #{tpu_custom_call.1} parent=1 // loop_exit
      _
    %235 = vsyncpa [#allocation3], 1
    %s236 = scalar_lea.sflag [#allocation3], 1
    %237 = vsyncpa %s236, 1
    %238 = vsyncpa [#allocation4], 1
    %s239 = scalar_lea.sflag [#allocation4], 1
    %240 = vsyncpa %s239, 1

</llo_original>
